<compile_context>
chip_gen: v7x
topology: tpu7x:2x2x1
jax: 0.10.0
libtpu: 0.0.40
codegen_flags: <defaults>
</compile_context>

<pallas_src>
import functools

import jax
import jax.numpy as jnp
from jax import lax
from jax.experimental import pallas as pl
from jax.experimental.pallas import tpu as pltpu


def _adain_kernel(x_ref, cond_ref, ws_ref, wb_ref, o_ref, *, eps):
    # x_ref:    (1, TILE_T, C)   token tile of batch b
    # cond_ref: (1, 1, D_COND)   conditioning vector of batch b
    # ws_ref:   (D_COND, C)      weight rows producing `scale` (resident)
    # wb_ref:   (D_COND, C)      weight rows producing `bias`  (resident)
    x = x_ref[0].astype(jnp.float32)          # (TILE_T, C)
    cond = cond_ref[0].astype(jnp.float32)    # (1, D_COND)

    # Tiny MXU matmuls for the per-batch affine parameters (recomputed per
    # tile: O(d_cond*C) MACs, negligible vs. the O(TILE_T*C) VPU work, and it
    # keeps both grid axes safely "parallel").
    scale = jnp.dot(cond, ws_ref[...].astype(jnp.float32),
                    preferred_element_type=jnp.float32)   # (1, C)
    bias = jnp.dot(cond, wb_ref[...].astype(jnp.float32),
                   preferred_element_type=jnp.float32)    # (1, C)

    # feature_norm along the channel (last) axis: biased variance, eps=1e-14.
    mean = jnp.mean(x, axis=-1, keepdims=True)            # (TILE_T, 1)
    xc = x - mean
    var = jnp.mean(xc * xc, axis=-1, keepdims=True)       # (TILE_T, 1)
    xn = xc * lax.rsqrt(var + eps)                        # rsqrt -> EUP slot

    o_ref[0] = (xn * (1.0 + scale) + bias).astype(o_ref.dtype)


def adain_forward(x, cond, weight, *, eps=1e-14, tile_t=512):
    """Pallas equivalent of AdaIN.forward.

    x:      (B, T, C)
    cond:   (B, 1, d_cond) or (B, d_cond)
    weight: (2*C, d_cond)   -- torch nn.Linear(d_cond, 2*C, bias=False).weight
    returns (B, T, C) in x.dtype
    """
    if cond.ndim == 2:
        cond = cond[:, None, :]
    B, T, C = x.shape
    Bc, one, d_cond = cond.shape
    assert Bc == B and one == 1
    assert weight.shape == (2 * C, d_cond)

    # chunk(2, dim=-1): first C output features -> scale, last C -> bias.
    # Transpose once in the wrapper so the kernel matmul is (d_cond, C),
    # contraction-major / lane-dense on the output columns.
    w_scale = jnp.transpose(weight[:C, :])   # (d_cond, C)
    w_bias = jnp.transpose(weight[C:, :])    # (d_cond, C)

    # Token tile: multiple of 8 sublanes (or the full T). 512 fits the default
    # scoped VMEM everywhere; sweep larger (with vmem_limit_bytes) on v6e,
    # smaller (~1-2K rows max) on v7x's 64 MiB VMEM.
    tile_t = min(tile_t, T)
    if tile_t != T:
        tile_t = max(8, (tile_t // 8) * 8)
    grid_t = pl.cdiv(T, tile_t)

    kernel = functools.partial(_adain_kernel, eps=float(eps))

    out = pl.pallas_call(
        kernel,
        grid=(B, grid_t),
        in_specs=[
            pl.BlockSpec((1, tile_t, C), lambda b, t: (b, t, 0)),
            pl.BlockSpec((1, 1, d_cond), lambda b, t: (b, 0, 0)),
            pl.BlockSpec((d_cond, C), lambda b, t: (0, 0)),
            pl.BlockSpec((d_cond, C), lambda b, t: (0, 0)),
        ],
        out_specs=pl.BlockSpec((1, tile_t, C), lambda b, t: (b, t, 0)),
        out_shape=jax.ShapeDtypeStruct((B, T, C), x.dtype),
        compiler_params=pltpu.CompilerParams(
            dimension_semantics=("parallel", "parallel")),
    )(x, cond, w_scale, w_bias)
    return out


def _adain_ref(x, cond, weight, eps=1e-14):
    """Pure-JAX reference mirroring the PyTorch module."""
    if cond.ndim == 2:
        cond = cond[:, None, :]
    sb = jnp.matmul(cond, weight.T)           # (B, 1, 2*C)
    C = x.shape[-1]
    scale, bias = sb[..., :C], sb[..., C:]
    mean = jnp.mean(x, axis=-1, keepdims=True)
    var = jnp.mean(jnp.square(x - mean), axis=-1, keepdims=True)
    xn = (x - mean) / jnp.sqrt(var + eps)
    return xn * (1.0 + scale) + bias


if __name__ == "__main__":
    key = jax.random.PRNGKey(0)
    k_w, k_x, k_c = jax.random.split(key, 3)

    B, T = 2, 8
    d_hid = 32       # C
    d_cond = 128     # torch default when d_cond is None

    # nn.Linear default init: U(-1/sqrt(fan_in), 1/sqrt(fan_in))
    bound = 1.0 / (d_cond ** 0.5)
    weight = jax.random.uniform(k_w, (2 * d_hid, d_cond),
                                minval=-bound, maxval=bound, dtype=jnp.float32)
    x = jax.random.normal(k_x, (B, T, d_hid), dtype=jnp.float32)
    cond = jax.random.normal(k_c, (B, 1, d_cond), dtype=jnp.float32)

    out = adain_forward(x, cond, weight)
    jax.block_until_ready(out)

    assert out.shape == (B, T, d_hid)
    assert out.dtype == jnp.float32

    ref = _adain_ref(x, cond, weight)
    max_err = float(jnp.max(jnp.abs(out - ref)))
    assert jnp.allclose(out, ref, atol=1e-4, rtol=1e-4), max_err

    print("KERNEL_OK")
</pallas_src>

<mosaic_0001>
module attributes {stable_mosaic.version = 11 : i64} {
  func.func @_adain_kernel(%arg0: i32, %arg1: i32, %arg2: memref<1x8x32xf32, #tpu.memory_space<vmem>>, %arg3: memref<1x1x128xf32, #tpu.memory_space<vmem>>, %arg4: memref<128x32xf32, #tpu.memory_space<vmem>>, %arg5: memref<128x32xf32, #tpu.memory_space<vmem>>, %arg6: memref<1x8x32xf32, #tpu.memory_space<vmem>>) attributes {dimension_semantics = [#tpu.dimension_semantics<parallel>, #tpu.dimension_semantics<parallel>], iteration_bounds = array<i64: 2, 1>, scalar_prefetch = 0 : i64, scratch_operands = 0 : i64, tpu.core_type = #tpu.core_type<tc>, window_params = [{transform_indices = @transform_0, window_bounds = array<i64: 1, 8, 32>}, {transform_indices = @transform_1, window_bounds = array<i64: 1, 1, 128>}, {pipeline_mode = #tpu.pipeline_mode<synchronous>, transform_indices = @transform_2, window_bounds = array<i64: 128, 32>}, {pipeline_mode = #tpu.pipeline_mode<synchronous>, transform_indices = @transform_3, window_bounds = array<i64: 128, 32>}, {transform_indices = @transform_4, window_bounds = array<i64: 1, 8, 32>}]} {
    %c0 = arith.constant 0 : index
    %c0_0 = arith.constant 0 : index
    %c0_1 = arith.constant 0 : index
    %0 = vector.load %arg2[%c0, %c0_0, %c0_1] : memref<1x8x32xf32, #tpu.memory_space<vmem>>, vector<1x8x32xf32>
    %1 = vector.shape_cast %0 : vector<1x8x32xf32> to vector<8x32xf32>
    %c0_2 = arith.constant 0 : index
    %c0_3 = arith.constant 0 : index
    %c0_4 = arith.constant 0 : index
    %2 = vector.load %arg3[%c0_2, %c0_3, %c0_4] : memref<1x1x128xf32, #tpu.memory_space<vmem>>, vector<1x1x128xf32>
    %3 = vector.shape_cast %2 : vector<1x1x128xf32> to vector<1x128xf32>
    %c0_5 = arith.constant 0 : index
    %c0_6 = arith.constant 0 : index
    %4 = vector.load %arg4[%c0_5, %c0_6] : memref<128x32xf32, #tpu.memory_space<vmem>>, vector<128x32xf32>
    %cst = arith.constant dense<0.000000e+00> : vector<1x32xf32>
    %5 = tpu.matmul %3, %4, %cst {dimension_numbers = #tpu.dot_dimension_numbers<[1], [0], [0], [1], [0, 0, 1, 1], [], []>} : vector<1x128xf32>, vector<128x32xf32>, vector<1x32xf32> -> vector<1x32xf32>
    %c0_7 = arith.constant 0 : index
    %c0_8 = arith.constant 0 : index
    %6 = vector.load %arg5[%c0_7, %c0_8] : memref<128x32xf32, #tpu.memory_space<vmem>>, vector<128x32xf32>
    %cst_9 = arith.constant dense<0.000000e+00> : vector<1x32xf32>
    %7 = tpu.matmul %3, %6, %cst_9 {dimension_numbers = #tpu.dot_dimension_numbers<[1], [0], [0], [1], [0, 0, 1, 1], [], []>} : vector<1x128xf32>, vector<128x32xf32>, vector<1x32xf32> -> vector<1x32xf32>
    %cst_10 = arith.constant dense<0.000000e+00> : vector<8xf32>
    %8 = vector.multi_reduction <add>, %1, %cst_10 [1] : vector<8x32xf32> to vector<8xf32>
    %9 = vector.shape_cast %8 : vector<8xf32> to vector<8x1xf32>
    %cst_11 = arith.constant 3.200000e+01 : f32
    %10 = vector.broadcast %cst_11 : f32 to vector<8x1xf32>
    %11 = arith.divf %9, %10 : vector<8x1xf32>
    %12 = vector.broadcast %11 : vector<8x1xf32> to vector<8x32xf32>
    %13 = arith.subf %1, %12 : vector<8x32xf32>
    %14 = arith.mulf %13, %13 : vector<8x32xf32>
    %cst_12 = arith.constant dense<0.000000e+00> : vector<8xf32>
    %15 = vector.multi_reduction <add>, %14, %cst_12 [1] : vector<8x32xf32> to vector<8xf32>
    %16 = vector.shape_cast %15 : vector<8xf32> to vector<8x1xf32>
    %cst_13 = arith.constant 3.200000e+01 : f32
    %17 = vector.broadcast %cst_13 : f32 to vector<8x1xf32>
    %18 = arith.divf %16, %17 : vector<8x1xf32>
    %cst_14 = arith.constant 9.99999982E-15 : f32
    %19 = vector.broadcast %cst_14 : f32 to vector<8x1xf32>
    %20 = arith.addf %18, %19 : vector<8x1xf32>
    %21 = math.rsqrt %20 : vector<8x1xf32>
    %22 = vector.broadcast %21 : vector<8x1xf32> to vector<8x32xf32>
    %23 = arith.mulf %13, %22 : vector<8x32xf32>
    %cst_15 = arith.constant 1.000000e+00 : f32
    %24 = vector.broadcast %cst_15 : f32 to vector<1x32xf32>
    %25 = arith.addf %24, %5 : vector<1x32xf32>
    %26 = vector.broadcast %25 : vector<1x32xf32> to vector<8x32xf32>
    %27 = arith.mulf %23, %26 : vector<8x32xf32>
    %28 = vector.broadcast %7 : vector<1x32xf32> to vector<8x32xf32>
    %29 = arith.addf %27, %28 : vector<8x32xf32>
    %c0_16 = arith.constant 0 : index
    %c0_17 = arith.constant 0 : index
    %c0_18 = arith.constant 0 : index
    %30 = vector.load %arg6[%c0_16, %c0_17, %c0_18] : memref<1x8x32xf32, #tpu.memory_space<vmem>>, vector<1x8x32xf32>
    %31 = vector.shape_cast %30 : vector<1x8x32xf32> to vector<8x32xf32>
    %32 = vector.shape_cast %29 : vector<8x32xf32> to vector<1x8x32xf32>
    tpu.vector_store %arg6[%c0_16, %c0_17, %c0_18], %32 {strides = array<i32>} : memref<1x8x32xf32, #tpu.memory_space<vmem>>, vector<1x8x32xf32>,
    return
  }
  func.func @transform_0(%arg0: i32, %arg1: i32) -> (i32, i32, i32) {
    %c0_i32 = arith.constant 0 : i32
    %c0_i32_0 = arith.constant 0 : i32
    return %arg0, %arg1, %c0_i32 : i32, i32, i32
  }
  func.func @transform_1(%arg0: i32, %arg1: i32) -> (i32, i32, i32) {
    %c0_i32 = arith.constant 0 : i32
    %c0_i32_0 = arith.constant 0 : i32
    %c0_i32_1 = arith.constant 0 : i32
    return %arg0, %c0_i32, %c0_i32_0 : i32, i32, i32
  }
  func.func @transform_2(%arg0: i32, %arg1: i32) -> (i32, i32) {
    %c0_i32 = arith.constant 0 : i32
    %c0_i32_0 = arith.constant 0 : i32
    %c0_i32_1 = arith.constant 0 : i32
    return %c0_i32, %c0_i32_0 : i32, i32
  }
  func.func @transform_3(%arg0: i32, %arg1: i32) -> (i32, i32) {
    %c0_i32 = arith.constant 0 : i32
    %c0_i32_0 = arith.constant 0 : i32
    %c0_i32_1 = arith.constant 0 : i32
    return %c0_i32, %c0_i32_0 : i32, i32
  }
  func.func @transform_4(%arg0: i32, %arg1: i32) -> (i32, i32, i32) {
    %c0_i32 = arith.constant 0 : i32
    %c0_i32_0 = arith.constant 0 : i32
    return %arg0, %arg1, %c0_i32 : i32, i32, i32
  }
}

</mosaic_0001>

<llo_original>
// kernel: tpu_custom_call.1
$region0: #{tpu_custom_call.1}
  #allocation0 [shape = 'u32[]', space=smem, size = 0x4, offset = 0x4, fixed_abs, tag = 'smem constant byte address 0x4 - core index']
  #allocation1 [shape = 'u32[144,128]{1,0:T(1,128)}', space=vmem, size = 0x12000, scoped, tag = 'internal scratch']
  %s0 = inlined_call_operand.vmem [shape: f32[2,8,32], index: 0, kind: input, shape index: {}]
  %s1 = inlined_call_operand.vmem [shape: f32[2,1,128], index: 1, kind: input, shape index: {}]
  %s2 = inlined_call_operand.vmem [shape: f32[128,32], index: 2, kind: input, shape index: {}]
  %s3 = inlined_call_operand.vmem [shape: f32[128,32], index: 3, kind: input, shape index: {}]
  %s4 = inlined_call_operand.hbm [shape: f32[2,8,32], index: 4, kind: output, shape index: {}]
  %s5 = sld [smem:[#allocation0]]
  $region49: #{tpu_custom_call.1} parent=0
    _
  %s7 = ssub.s32 1, %s5
  %s8 = scalar_select 0, %s7, %s5
  $region1: #{tpu_custom_call.1} parent=0
    #allocation2 [shape = 'u8[8192]{0}', space=vmem, size = 0x2000, scoped, tag = 'output window, operand 0']
    #allocation3 [shape = 's32[2]{0}', space=sflag, size = 0x8, scoped, tag = 'scoped memory for tpu_custom_call.1']
    %9 = vsyncpa [#allocation3], 0
    %s10 = scalar_lea.sflag [#allocation3], 1
    %11 = vsyncpa %s10, 0
    loop: start=0, step=1, limit=4
    $region2: #{tpu_custom_call.1} parent=1 // loop_pre_header
      _
    $region3: #{tpu_custom_call.1} parent=1 // loop_header
      %s13 = sphi 0, %s17
      %p14 = scmp.ge.s32.totalorder %s13, 4
      %s20 = sphi 0, %s32
      %s21 = sphi 0, %s28
      %s22 = sphi 0, %s20
      %s23 = sphi 0, %s21
      %s24 = sphi 0, %s22
      %s25 = sphi 0, %s23
      %s37 = sphi 0, %s39
      %s40 = sphi 0, %s37
      %s41 = sphi 0, %s40
      %s57 = sphi 0, %s41
      %s63 = sphi 0, %s65
      %s66 = sphi 0, %s63
      %s67 = sphi 0, %s66
      %s83 = sphi 0, %s67
      %s87 = sphi 0, %s87
      %s89 = sphi 0, %s87
      %s90 = sphi 0, %s89
      %s104 = sphi 0, %s90
      %s108 = sphi 0, %s108
      %s110 = sphi 0, %s108
      %s111 = sphi 0, %s110
      %s125 = sphi 0, %s111
      %s133 = sphi 0, %s135
      %s136 = sphi 0, %s133
      %s137 = sphi 0, %s136
      %s153 = sphi 0, %s137
    $region4: #{tpu_custom_call.1} parent=1 // loop_header_branch
      %16 = sbr.rel (%p14) target = $region8
    $region5: #{tpu_custom_call.1} parent=1 // loop_body
      %s18 = ssub.s32 %s13, 1
      %s19 = ssub.s32 %s13, 2
      %s26 = sadd.s32 1, %s21
      %p27 = scmp.ge.s32.totalorder %s26, 1
      %s28 = scalar_select %p27, 0, %s26
      %s29 = sadd.s32 1, %s20
      %s30 = scalar_select %p27, %s29, %s20
      %p31 = scmp.ge.s32.totalorder %s30, 2
      %s32 = scalar_select %p31, 0, %s30
      %s33 = ssub.s32 %s20, %s32
      %s34 = ssub.s32 %s21, %s28
      %s35 = sor.u32 %s33, %s34
      %p36 = scmp.eq.s32.totalorder %s35, 0
      %s38 = sadd.s32 %s37, 1
      %s39 = scalar_select %p36, %s37, %s38
      %p42 = pneg %p36
      %p43 = scmp.eq.s32.totalorder %s13, 1
      %p44 = por %p42, %p43
      %p45 = scmp.ne.s32.totalorder %s37, %s40
      %p46 = scmp.eq.s32.totalorder %s13, 0
      %p47 = por %p45, %p46
      %p48 = scmp.ne.s32.totalorder %s37, %s40
      %p49 = scmp.eq.s32.totalorder %s18, 1
      %p50 = por %p48, %p49
      %p51 = scmp.ne.s32.totalorder %s40, %s41
      %p52 = scmp.eq.s32.totalorder %s18, 0
      %p53 = por %p51, %p52
      %p54 = scmp.ne.s32.totalorder %s40, %s41
      %p55 = scmp.eq.s32.totalorder %s19, 1
      %p56 = por %p54, %p55
      %p58 = scmp.ne.s32.totalorder %s41, %s57
      %p59 = scmp.eq.s32.totalorder %s19, 0
      %p60 = por %p58, %p59
      %s61 = ssub.s32 %s20, %s32
      %p62 = scmp.eq.s32.totalorder %s61, 0
      %s64 = sadd.s32 %s63, 1
      %s65 = scalar_select %p62, %s63, %s64
      %p68 = pneg %p62
      %p69 = scmp.eq.s32.totalorder %s13, 1
      %p70 = por %p68, %p69
      %p71 = scmp.ne.s32.totalorder %s63, %s66
      %p72 = scmp.eq.s32.totalorder %s13, 0
      %p73 = por %p71, %p72
      %p74 = scmp.ne.s32.totalorder %s63, %s66
      %p75 = scmp.eq.s32.totalorder %s18, 1
      %p76 = por %p74, %p75
      %p77 = scmp.ne.s32.totalorder %s66, %s67
      %p78 = scmp.eq.s32.totalorder %s18, 0
      %p79 = por %p77, %p78
      %p80 = scmp.ne.s32.totalorder %s66, %s67
      %p81 = scmp.eq.s32.totalorder %s19, 1
      %p82 = por %p80, %p81
      %p84 = scmp.ne.s32.totalorder %s67, %s83
      %p85 = scmp.eq.s32.totalorder %s19, 0
      %p86 = por %p84, %p85
      %s88 = sadd.s32 %s87, 1
      %p91 = scmp.eq.s32.totalorder %s13, 1
      %p92 = scmp.ne.s32.totalorder %s87, %s89
      %p93 = scmp.eq.s32.totalorder %s13, 0
      %p94 = por %p92, %p93
      %p95 = scmp.ne.s32.totalorder %s87, %s89
      %p96 = scmp.eq.s32.totalorder %s18, 1
      %p97 = por %p95, %p96
      %p98 = scmp.ne.s32.totalorder %s89, %s90
      %p99 = scmp.eq.s32.totalorder %s18, 0
      %p100 = por %p98, %p99
      %p101 = scmp.ne.s32.totalorder %s89, %s90
      %p102 = scmp.eq.s32.totalorder %s19, 1
      %p103 = por %p101, %p102
      %p105 = scmp.ne.s32.totalorder %s90, %s104
      %p106 = scmp.eq.s32.totalorder %s19, 0
      %p107 = por %p105, %p106
      %s109 = sadd.s32 %s108, 1
      %p112 = scmp.eq.s32.totalorder %s13, 1
      %p113 = scmp.ne.s32.totalorder %s108, %s110
      %p114 = scmp.eq.s32.totalorder %s13, 0
      %p115 = por %p113, %p114
      %p116 = scmp.ne.s32.totalorder %s108, %s110
      %p117 = scmp.eq.s32.totalorder %s18, 1
      %p118 = por %p116, %p117
      %p119 = scmp.ne.s32.totalorder %s110, %s111
      %p120 = scmp.eq.s32.totalorder %s18, 0
      %p121 = por %p119, %p120
      %p122 = scmp.ne.s32.totalorder %s110, %s111
      %p123 = scmp.eq.s32.totalorder %s19, 1
      %p124 = por %p122, %p123
      %p126 = scmp.ne.s32.totalorder %s111, %s125
      %p127 = scmp.eq.s32.totalorder %s19, 0
      %p128 = por %p126, %p127
      %s129 = ssub.s32 %s20, %s32
      %s130 = ssub.s32 %s21, %s28
      %s131 = sor.u32 %s129, %s130
      %p132 = scmp.eq.s32.totalorder %s131, 0
      %s134 = sadd.s32 %s133, 1
      %s135 = scalar_select %p132, %s133, %s134
      %p138 = pneg %p132
      %p139 = scmp.eq.s32.totalorder %s13, 1
      %p140 = por %p138, %p139
      %p141 = scmp.ne.s32.totalorder %s133, %s136
      %p142 = scmp.eq.s32.totalorder %s13, 0
      %p143 = por %p141, %p142
      %p144 = scmp.ne.s32.totalorder %s133, %s136
      %p145 = scmp.eq.s32.totalorder %s18, 1
      %p146 = por %p144, %p145
      %p147 = scmp.ne.s32.totalorder %s136, %s137
      %p148 = scmp.eq.s32.totalorder %s18, 0
      %p149 = por %p147, %p148
      %p150 = scmp.ne.s32.totalorder %s136, %s137
      %p151 = scmp.eq.s32.totalorder %s19, 1
      %p152 = por %p150, %p151
      %p154 = scmp.ne.s32.totalorder %s137, %s153
      %p155 = scmp.eq.s32.totalorder %s19, 0
      %p156 = por %p154, %p155
      %p157 = scmp.le.s32.totalorder 1, %s13
      %p158 = scmp.lt.s32.totalorder %s13, 3
      %p159 = pnand %p157, %p158
      %p160 = pneg %p159
      // Predicated region
      $region9: #{tpu_custom_call.1} parent=5 // pred_check
        _
      $region10: #{tpu_custom_call.1} parent=5 // pred_check_branch
        %162 = sbr.rel (%p159) target = $region12
      $region11: #{tpu_custom_call.1} parent=5 // pred_region
        %s163 = ssub.s32 %s13, 1
        // Predicated region
        $region13: #{tpu_custom_call.1} parent=11 // pred_check
          %p164 = pneg %p100
        $region14: #{tpu_custom_call.1} parent=11 // pred_check_branch
          %166 = sbr.rel (%p164) target = $region16
        $region15: #{tpu_custom_call.1} parent=11 // pred_region
          _
        $region16: #{tpu_custom_call.1} parent=11 // pred_fallthru
          _
        // Predicated region
        $region17: #{tpu_custom_call.1} parent=11 // pred_check
          %p167 = pneg %p121
        $region18: #{tpu_custom_call.1} parent=11 // pred_check_branch
          %169 = sbr.rel (%p167) target = $region20
        $region19: #{tpu_custom_call.1} parent=11 // pred_region
          _
        $region20: #{tpu_custom_call.1} parent=11 // pred_fallthru
          _
      $region12: #{tpu_custom_call.1} parent=5 // pred_fallthru
        _
      %p170 = scmp.lt.s32.totalorder %s13, 2
      // Predicated region
      $region21: #{tpu_custom_call.1} parent=5 // pred_check
        %p171 = pneg %p170
      $region22: #{tpu_custom_call.1} parent=5 // pred_check_branch
        %173 = sbr.rel (%p171) target = $region24
      $region23: #{tpu_custom_call.1} parent=5 // pred_region
        // Predicated region
        $region25: #{tpu_custom_call.1} parent=23 // pred_check
          %p174 = pneg %p47
        $region26: #{tpu_custom_call.1} parent=23 // pred_check_branch
          %176 = sbr.rel (%p174) target = $region28
        $region27: #{tpu_custom_call.1} parent=23 // pred_region
          %p177 = scmp.lt.s32.totalorder %s20, 1
          %s178 = scalar_select %p177, %s20, 1
          %p179 = scmp.lt.s32.totalorder %s21, 0
          %s180 = scalar_select %p179, %s21, 0
          %s181 = sadd.s32 %s180, %s178
          %s182 = smul.addr %s181, 8
          %s183 = scalar_lea.vmem %s0, %s182
        $region28: #{tpu_custom_call.1} parent=23 // pred_fallthru
          _
        // Predicated region
        $region29: #{tpu_custom_call.1} parent=23 // pred_check
          %p184 = pneg %p73
        $region30: #{tpu_custom_call.1} parent=23 // pred_check_branch
          %186 = sbr.rel (%p184) target = $region32
        $region31: #{tpu_custom_call.1} parent=23 // pred_region
          %p187 = scmp.lt.s32.totalorder %s20, 1
          %s188 = scalar_select %p187, %s20, 1
          %s189 = scalar_lea.vmem %s1, %s188
        $region32: #{tpu_custom_call.1} parent=23 // pred_fallthru
          _
      $region24: #{tpu_custom_call.1} parent=5 // pred_fallthru
        _
      %p190 = scmp.le.s32.totalorder 1, %s13
      %p191 = scmp.lt.s32.totalorder %s13, 3
      %p192 = pnand %p190, %p191
      %p193 = pneg %p192
      // Predicated region
      $region33: #{tpu_custom_call.1} parent=5 // pred_check
        _
      $region34: #{tpu_custom_call.1} parent=5 // pred_check_branch
        %195 = sbr.rel (%p192) target = $region36
      $region35: #{tpu_custom_call.1} parent=5 // pred_region
        %s196 = ssub.s32 %s13, 1
        %p197 = scmp.lt.s32.totalorder %s22, 1
        %s198 = scalar_select %p197, %s22, 1
        %p199 = scmp.lt.s32.totalorder %s23, 0
        %s200 = scalar_select %p199, %s23, 0
        %s201 = sadd.s32 %s200, %s198
        %s202 = smul.addr %s201, 8
        %s203 = scalar_lea.vmem %s0, %s202
        %p204 = pneg %p53
        %p205 = pneg %p50
        %p206 = scmp.lt.s32.totalorder %s22, 1
        %s207 = scalar_select %p206, %s22, 1
        %s208 = scalar_lea.vmem %s1, %s207
        %p209 = pneg %p79
        %p210 = pneg %p76
        %p211 = pneg %p100
        %p212 = pneg %p97
        %p213 = pneg %p121
        %p214 = pneg %p118
        %p215 = pneg %p149
        %p216 = pneg %p146
        %s217 = sand.u32 %s136, 1
        %s218 = scalar_lea.sflag [#allocation3], %s217
        %s219 = sand.u32 %s136, 1
        %s220 = smul.addr %s219, 8
        %s221 = scalar_lea.vmem [#allocation2], %s220
        %p222 = scmp.lt.s32.totalorder %s22, 1
        %s223 = scalar_select %p222, %s22, 1
        %p224 = scmp.lt.s32.totalorder %s23, 0
        %s225 = scalar_select %p224, %s23, 0
        %s226 = sadd.s32 %s225, %s223
        %s227 = smul.addr %s226, 8
        %s228 = scalar_lea.vmem %s0, %s227
        %p229 = scmp.lt.s32.totalorder %s22, 1
        %s230 = scalar_select %p229, %s22, 1
        %s231 = scalar_lea.vmem %s1, %s230
        %v232 = vld [vmem:[%s228] sm:$0xff]
        %v233 = vld [vmem:[%s231] sm:$0x1]
        %v234 = vld [vmem:[%s2] sm:$0xff]
        %v235 = vld [vmem:[%s2 + $0x8] sm:$0xff]
        %v236 = vld [vmem:[%s2 + $0x10] sm:$0xff]
        %v237 = vld [vmem:[%s2 + $0x18] sm:$0xff]
        %v238 = vld [vmem:[%s2 + $0x20] sm:$0xff]
        %v239 = vld [vmem:[%s2 + $0x28] sm:$0xff]
        %v240 = vld [vmem:[%s2 + $0x30] sm:$0xff]
        %v241 = vld [vmem:[%s2 + $0x38] sm:$0xff]
        %v242 = vld [vmem:[%s2 + $0x40] sm:$0xff]
        %v243 = vld [vmem:[%s2 + $0x48] sm:$0xff]
        %v244 = vld [vmem:[%s2 + $0x50] sm:$0xff]
        %v245 = vld [vmem:[%s2 + $0x58] sm:$0xff]
        %v246 = vld [vmem:[%s2 + $0x60] sm:$0xff]
        %v247 = vld [vmem:[%s2 + $0x68] sm:$0xff]
        %v248 = vld [vmem:[%s2 + $0x70] sm:$0xff]
        %v249 = vld [vmem:[%s2 + $0x78] sm:$0xff]
        %v250 = vld [vmem:[%s3] sm:$0xff]
        %v251 = vld [vmem:[%s3 + $0x8] sm:$0xff]
        %v252 = vld [vmem:[%s3 + $0x10] sm:$0xff]
        %v253 = vld [vmem:[%s3 + $0x18] sm:$0xff]
        %v254 = vld [vmem:[%s3 + $0x20] sm:$0xff]
        %v255 = vld [vmem:[%s3 + $0x28] sm:$0xff]
        %v256 = vld [vmem:[%s3 + $0x30] sm:$0xff]
        %v257 = vld [vmem:[%s3 + $0x38] sm:$0xff]
        %v258 = vld [vmem:[%s3 + $0x40] sm:$0xff]
        %v259 = vld [vmem:[%s3 + $0x48] sm:$0xff]
        %v260 = vld [vmem:[%s3 + $0x50] sm:$0xff]
        %v261 = vld [vmem:[%s3 + $0x58] sm:$0xff]
        %v262 = vld [vmem:[%s3 + $0x60] sm:$0xff]
        %v263 = vld [vmem:[%s3 + $0x68] sm:$0xff]
        %v264 = vld [vmem:[%s3 + $0x70] sm:$0xff]
        %v265 = vld [vmem:[%s3 + $0x78] sm:$0xff]
        %266 = vmatprep.subr.mxu0 0.0
        %267 = vmatpush1.msra.mxu0 %v250
        %268 = vmatprep.subr.mxu0 0.0
        %269 = vmatpush1.msra.mxu0 %v251
        %270 = vmatprep.subr.mxu0 0.0
        %271 = vmatpush1.msra.mxu0 %v252
        %272 = vmatprep.subr.mxu0 0.0
        %273 = vmatpush1.msra.mxu0 %v253
        %274 = vmatprep.subr.mxu0 0.0
        %275 = vmatpush1.msra.mxu0 %v254
        %276 = vmatprep.subr.mxu0 0.0
        %277 = vmatpush1.msra.mxu0 %v255
        %278 = vmatprep.subr.mxu0 0.0
        %279 = vmatpush1.msra.mxu0 %v256
        %280 = vmatprep.subr.mxu0 0.0
        %281 = vmatpush1.msra.mxu0 %v257
        %282 = vmatprep.subr.mxu0 0.0
        %283 = vmatpush1.msra.mxu0 %v258
        %284 = vmatprep.subr.mxu0 0.0
        %285 = vmatpush1.msra.mxu0 %v259
        %286 = vmatprep.subr.mxu0 0.0
        %287 = vmatpush1.msra.mxu0 %v260
        %288 = vmatprep.subr.mxu0 0.0
        %289 = vmatpush1.msra.mxu0 %v261
        %290 = vmatprep.subr.mxu0 0.0
        %291 = vmatpush1.msra.mxu0 %v262
        %292 = vmatprep.subr.mxu0 0.0
        %293 = vmatpush1.msra.mxu0 %v263
        %294 = vmatprep.subr.mxu0 0.0
        %295 = vmatpush1.msra.mxu0 %v264
        %296 = vmatprep.subr.mxu0 0.0
        %297 = vmatpush1.msra.mxu0 %v265
        %298 = vmatprep.subr.mxu0 0.0
        %299 = vmatpush1.msra.mxu0 0.0
        %300 = vmatprep.subr.mxu0 0.0
        %301 = vmatpush1.msra.mxu0 0.0
        %302 = vmatprep.subr.mxu0 0.0
        %303 = vmatpush1.msra.mxu0 0.0
        %304 = vmatprep.subr.mxu0 0.0
        %305 = vmatpush1.msra.mxu0 0.0
        %306 = vmatprep.subr.mxu0 0.0
        %307 = vmatpush1.msra.mxu0 0.0
        %308 = vmatprep.subr.mxu0 0.0
        %309 = vmatpush1.msra.mxu0 0.0
        %310 = vmatprep.subr.mxu0 0.0
        %311 = vmatpush1.msra.mxu0 0.0
        %312 = vmatprep.subr.mxu0 0.0
        %313 = vmatpush1.msra.mxu0 0.0
        %314 = vmatprep.subr.mxu0 0.0
        %315 = vmatpush1.msra.mxu0 0.0
        %316 = vmatprep.subr.mxu0 0.0
        %317 = vmatpush1.msra.mxu0 0.0
        %318 = vmatprep.subr.mxu0 0.0
        %319 = vmatpush1.msra.mxu0 0.0
        %320 = vmatprep.subr.mxu0 0.0
        %321 = vmatpush1.msra.mxu0 0.0
        %322 = vmatprep.subr.mxu0 0.0
        %323 = vmatpush1.msra.mxu0 0.0
        %324 = vmatprep.subr.mxu0 0.0
        %325 = vmatpush1.msra.mxu0 0.0
        %326 = vmatprep.subr.mxu0 0.0
        %327 = vmatpush1.msra.mxu0 0.0
        %328 = vmatprep.subr.mxu0 0.0
        %329 = vmatpush1.msra.mxu0 0.0
        %330 = vmatprep.mubr.f32.mxu0 0.0
        %331 = vmatmul.mubr.f32.gmra.mrb[0].mxu0 %v233
        %v332 = vpop.f32.mrb[0].mxu0
        %v333 = vadd.f32 0.0, %v332
        %v334 = vpop.f32.mrb[0].mxu0
        %335 = vdwg.mxu0
        %vm336 = vcmask 261120
        %v337 = vsel %vm336, %v232, 0.0
        %338 = vadd.xlane.f32.xlu0 %v337
        %v339 = vpop.xlane.xlu0 %338
        %v340 = vrcp.pop 32.0
        %v341 = vmul.f32 %v339, %v340
        %v342 = vsub.f32 %v232, %v341
        %v343 = vmul.f32 %v342, %v342
        %v344 = vsel %vm336, %v343, 0.0
        %345 = vadd.xlane.f32.xlu0 %v344
        %v346 = vpop.xlane.xlu0 %345
        %v347 = vmul.f32 %v346, %v340
        %v348 = vadd.f32 %v347, 1e-14
        %v349 = vrsqrt.pop %v348
        %v350 = vmul.f32 %v342, %v349
        %351 = vmatprep.subr.mxu0 0.0
        %352 = vmatpush1.msra.mxu0 %v234
        %353 = vmatprep.subr.mxu0 0.0
        %354 = vmatpush1.msra.mxu0 %v235
        %355 = vmatprep.subr.mxu0 0.0
        %356 = vmatpush1.msra.mxu0 %v236
        %357 = vmatprep.subr.mxu0 0.0
        %358 = vmatpush1.msra.mxu0 %v237
        %359 = vmatprep.subr.mxu0 0.0
        %360 = vmatpush1.msra.mxu0 %v238
        %361 = vmatprep.subr.mxu0 0.0
        %362 = vmatpush1.msra.mxu0 %v239
        %363 = vmatprep.subr.mxu0 0.0
        %364 = vmatpush1.msra.mxu0 %v240
        %365 = vmatprep.subr.mxu0 0.0
        %366 = vmatpush1.msra.mxu0 %v241
        %367 = vmatprep.subr.mxu0 0.0
        %368 = vmatpush1.msra.mxu0 %v242
        %369 = vmatprep.subr.mxu0 0.0
        %370 = vmatpush1.msra.mxu0 %v243
        %371 = vmatprep.subr.mxu0 0.0
        %372 = vmatpush1.msra.mxu0 %v244
        %373 = vmatprep.subr.mxu0 0.0
        %374 = vmatpush1.msra.mxu0 %v245
        %375 = vmatprep.subr.mxu0 0.0
        %376 = vmatpush1.msra.mxu0 %v246
        %377 = vmatprep.subr.mxu0 0.0
        %378 = vmatpush1.msra.mxu0 %v247
        %379 = vmatprep.subr.mxu0 0.0
        %380 = vmatpush1.msra.mxu0 %v248
        %381 = vmatprep.subr.mxu0 0.0
        %382 = vmatpush1.msra.mxu0 %v249
        %383 = vmatprep.subr.mxu0 0.0
        %384 = vmatpush1.msra.mxu0 0.0
        %385 = vmatprep.subr.mxu0 0.0
        %386 = vmatpush1.msra.mxu0 0.0
        %387 = vmatprep.subr.mxu0 0.0
        %388 = vmatpush1.msra.mxu0 0.0
        %389 = vmatprep.subr.mxu0 0.0
        %390 = vmatpush1.msra.mxu0 0.0
        %391 = vmatprep.subr.mxu0 0.0
        %392 = vmatpush1.msra.mxu0 0.0
        %393 = vmatprep.subr.mxu0 0.0
        %394 = vmatpush1.msra.mxu0 0.0
        %395 = vmatprep.subr.mxu0 0.0
        %396 = vmatpush1.msra.mxu0 0.0
        %397 = vmatprep.subr.mxu0 0.0
        %398 = vmatpush1.msra.mxu0 0.0
        %399 = vmatprep.subr.mxu0 0.0
        %400 = vmatpush1.msra.mxu0 0.0
        %401 = vmatprep.subr.mxu0 0.0
        %402 = vmatpush1.msra.mxu0 0.0
        %403 = vmatprep.subr.mxu0 0.0
        %404 = vmatpush1.msra.mxu0 0.0
        %405 = vmatprep.subr.mxu0 0.0
        %406 = vmatpush1.msra.mxu0 0.0
        %407 = vmatprep.subr.mxu0 0.0
        %408 = vmatpush1.msra.mxu0 0.0
        %409 = vmatprep.subr.mxu0 0.0
        %410 = vmatpush1.msra.mxu0 0.0
        %411 = vmatprep.subr.mxu0 0.0
        %412 = vmatpush1.msra.mxu0 0.0
        %413 = vmatprep.subr.mxu0 0.0
        %414 = vmatpush1.msra.mxu0 0.0
        %415 = vmatprep.mubr.f32.mxu0 0.0
        %416 = vmatmul.mubr.f32.gmra.mrb[0].mxu0 %v233
        %v417 = vpop.f32.mrb[0].mxu0
        %v418 = vadd.f32 1.0, %v417
        %v419 = vpop.f32.mrb[0].mxu0
        %420 = vdwg.mxu0
        %v421 = vlaneseq
        %v422 = vshrl.u32 %v421, 7
        %v423 = vsub.s32 0, %v422
        %v424 = vrot.slane %v418, %v423
        %v425 = vmul.f32 %v350, %v424
        %v426 = vlaneseq
        %v427 = vshrl.u32 %v426, 7
        %v428 = vsub.s32 0, %v427
        %v429 = vrot.slane %v333, %v428
        %v430 = vadd.f32 %v425, %v429
        %431 = vst.msk [vmem:[%s221] sm:$0xff] %vm336, %v430
        %s432 = sand.u32 %s136, 1
        %s433 = scalar_lea.sflag [#allocation3], %s432
        %s434 = sand.u32 %s136, 1
        %s435 = smul.addr %s434, 8
        %s436 = scalar_lea.vmem [#allocation2], %s435
        // Predicated region
        $region37: #{tpu_custom_call.1} parent=35 // pred_check
          %p437 = pneg %p146
        $region38: #{tpu_custom_call.1} parent=35 // pred_check_branch
          %439 = sbr.rel (%p437) target = $region40
        $region39: #{tpu_custom_call.1} parent=35 // pred_region
          %s441 = ssub.s32 128, 128
          %442 = vsyncadd %s433, %s441
          %s443 = sadd.s32 %s23, %s22
          %s444 = smul.addr %s443, 128
          %s445 = scalar_lea.hbm %s4, %s444
          %s447 = sshll.u32 %s436, 4
          %s448 = int_to_ptr.vmem [resolvable:$true] %s447
          %450 = dma.vmem_to_hbm [thread:$0]  %s448, 128, %s445, %s433
        $region40: #{tpu_custom_call.1} parent=35 // pred_fallthru
          _
      $region36: #{tpu_custom_call.1} parent=5 // pred_fallthru
        _
      %p451 = scmp.le.s32.totalorder 2, %s13
      // Predicated region
      $region41: #{tpu_custom_call.1} parent=5 // pred_check
        %p452 = pneg %p451
      $region42: #{tpu_custom_call.1} parent=5 // pred_check_branch
        %454 = sbr.rel (%p452) target = $region44
      $region43: #{tpu_custom_call.1} parent=5 // pred_region
        %s455 = ssub.s32 %s13, 2
        // Predicated region
        $region45: #{tpu_custom_call.1} parent=43 // pred_check
          %p456 = pneg %p152
        $region46: #{tpu_custom_call.1} parent=43 // pred_check_branch
          %458 = sbr.rel (%p456) target = $region48
        $region47: #{tpu_custom_call.1} parent=43 // pred_region
          %s459 = sand.u32 %s137, 1
          %s460 = scalar_lea.sflag [#allocation3], %s459
          %s461 = sand.u32 %s137, 1
          %s462 = smul.addr %s461, 8
          %s463 = scalar_lea.vmem [#allocation2], %s462
          %464 = dma.done %s460, 128
        $region48: #{tpu_custom_call.1} parent=43 // pred_fallthru
          _
      $region44: #{tpu_custom_call.1} parent=5 // pred_fallthru
        _
    $region6: #{tpu_custom_call.1} parent=1 // loop_footer
      %s17 = sadd.s32 1, %s13
    $region7: #{tpu_custom_call.1} parent=1 // loop_footer_branch
      %12 = sbr.rel target = $region3
    $region8: #{tpu_custom_call.1} parent=1 // loop_exit
      _
    %465 = vsyncpa [#allocation3], 1
    %s466 = scalar_lea.sflag [#allocation3], 1
    %467 = vsyncpa %s466, 1

</llo_original>
